<compile_context>
chip_gen: v6e
topology: v6e:2x2x1
jax: 0.10.0
libtpu: 0.0.40
codegen_flags: <defaults>
</compile_context>

<pallas_src>
import jax
import jax.numpy as jnp
import numpy as np
from jax.experimental import pallas as pl
from jax.experimental.pallas import tpu as pltpu


def noise_layer_kernel(x_ref, w_ref, noise_ref, o_ref):
    # (1, n) bias in f32, broadcast over the tile's batch rows.  One vmul on a
    # single sublane row per step, then the hot path is a broadcast vadd +
    # store per vreg -> the kernel sits on the HBM/DMA roofline.
    bias = w_ref[...] * noise_ref[...]                       # f32 (1, n)
    o_ref[...] = (x_ref[...].astype(jnp.float32) + bias).astype(o_ref.dtype)


def _round_up(v, m):
    return ((v + m - 1) // m) * m


# dtype-native sublane multiples (rows pack along sublanes for sub-32-bit).
_SUBLANE = {4: 8, 2: 16, 1: 32}


def _tpu_policy():
    """Return (vmem_budget_bytes, tb_cap_rows, vmem_limit_bytes_or_None, tc_per_chip)."""
    kind = ""
    try:
        kind = jax.devices()[0].device_kind.lower()
    except Exception:
        pass
    if "v7" in kind or "tpu7" in kind or "7x" in kind:
        # v7x: 64 MiB VMEM / TC (32 MiB scoped default), 2 TCs, ~3.2 TB/s HBM
        # -> bigger tiles pay off; keep >= 2 grid steps per TC (handled below).
        return 24 * 2**20, 1024, 32 * 2**20, 2
    if "v6" in kind:
        # v6e: 128 MiB physical VMEM; raise scoped limit so wide feature dims
        # still get the measured ~85%-of-roofline 512-row tile.
        return 48 * 2**20, 512, 64 * 2**20, 1
    if "v5" in kind:
        # v5e: 16 MiB scoped default -> stay conservative by default.
        return 12 * 2**20, 512, None, 1
    # Unknown backend: most conservative budget.
    return 12 * 2**20, 512, None, 1


def noise_layer(x, w, noise, *, force_pallas=False, max_tile_rows=None):
    """x: (batch, inputs_count), w: (inputs_count,), noise: (inputs_count,)."""
    batch, n = x.shape
    itemsize = jnp.dtype(x.dtype).itemsize

    # Tiny problems: a fused XLA elementwise beats a standalone kernel launch
    # (per-grid-step overhead ~0.35 us dwarfs the DMA at KiB-scale traffic).
    if not force_pallas and batch * n * itemsize < (1 << 20):
        bias = w.astype(jnp.float32) * noise.astype(jnp.float32)
        return (x.astype(jnp.float32) + bias).astype(x.dtype)

    # Lane-dense feature axis: pad to a multiple of 128 so stores are unmasked.
    n_pad = max(128, _round_up(n, 128))
    if n_pad != n:
        x_p = jnp.pad(x, ((0, 0), (0, n_pad - n)))
        w_p = jnp.pad(w, (0, n_pad - n))
        noise_p = jnp.pad(noise, (0, n_pad - n))
    else:
        x_p, w_p, noise_p = x, w, noise

    # Keep the (1, n) bias operands in f32 regardless of activation dtype.
    w2d = w_p.reshape(1, n_pad).astype(jnp.float32)
    noise2d = noise_p.reshape(1, n_pad).astype(jnp.float32)

    vmem_budget, tb_cap, vmem_limit, n_cores = _tpu_policy()
    sub = _SUBLANE.get(itemsize, 8)

    # Double-buffered x + out tiles dominate VMEM use: ~4 * tb * n_pad * itemsize.
    bytes_per_row = 4 * n_pad * itemsize
    max_rows_vmem = max(sub, int(vmem_budget // max(bytes_per_row, 1)))

    # Escape hatch (mainly v5e): if a very wide feature dim clamps the tile
    # hard, raise the scoped-VMEM limit instead of eating per-step overhead.
    if max_rows_vmem < 256 and vmem_limit is None:
        vmem_budget, vmem_limit = 48 * 2**20, 64 * 2**20
        max_rows_vmem = max(sub, int(vmem_budget // max(bytes_per_row, 1)))

    tb = min(batch, tb_cap, max_rows_vmem)
    if max_tile_rows is not None:
        tb = min(tb, max_tile_rows)

    # Megacore (v7x): make sure the "parallel" axis has work for both
    # TensorCores (>= 2 steps per core) whenever the batch is big enough.
    if n_cores > 1 and batch >= 2 * n_cores * sub:
        tb = min(tb, pl.cdiv(batch, 2 * n_cores))

    if tb < batch:
        tb = max(sub, (tb // sub) * sub)   # dtype-native sublane multiple
    else:
        tb = batch                         # full-extent block is always legal

    grid = (pl.cdiv(batch, tb),)

    compiler_kwargs = dict(dimension_semantics=("parallel",))
    if vmem_limit is not None:
        compiler_kwargs["vmem_limit_bytes"] = int(vmem_limit)

    out_p = pl.pallas_call(
        noise_layer_kernel,
        out_shape=jax.ShapeDtypeStruct((batch, n_pad), x.dtype),
        grid=grid,
        in_specs=[
            pl.BlockSpec((tb, n_pad), lambda i: (i, 0)),   # x: batch-tiled, lane-dense
            pl.BlockSpec((1, n_pad), lambda i: (0, 0)),    # w: same (1, n) block every step
            pl.BlockSpec((1, n_pad), lambda i: (0, 0)),    # noise: same (1, n) block
        ],
        out_specs=pl.BlockSpec((tb, n_pad), lambda i: (i, 0)),
        compiler_params=pltpu.CompilerParams(**compiler_kwargs),
        cost_estimate=pl.CostEstimate(
            flops=2 * batch * n_pad,
            transcendentals=0,
            bytes_accessed=(2 * batch * n_pad + 2 * n_pad) * itemsize,
        ),
    )(x_p, w2d, noise2d)

    return out_p[:, :n] if n_pad != n else out_p


def _reference(x, w, noise):
    return np.asarray(x, np.float64) + np.asarray(w, np.float64)[None, :] * np.asarray(
        noise, np.float64
    )[None, :]


if __name__ == "__main__":
    key = jax.random.PRNGKey(0)
    init_range = 0.001

    # ---- Test 1: basic Pallas path (batch=8, n=128, f32) -------------------
    k1x, k1w, k1n, key = jax.random.split(key, 4)
    batch, n = 8, 128
    w = init_range * (2.0 * jax.random.uniform(k1w, (n,), dtype=jnp.float32) - 1.0)
    x = jax.random.normal(k1x, (batch, n), dtype=jnp.float32)
    # Fresh, detached uniform[-1, 1) noise — the torch.rand(...)*2-1 draw.
    # TODO(synk): on real TPU the draw could live in-kernel via pltpu.prng_seed /
    # prng_random_bits, but those do not lower on the CPU/interpret fallback path.
    noise = jax.random.uniform(k1n, (n,), dtype=jnp.float32, minval=-1.0, maxval=1.0)

    out = jax.block_until_ready(noise_layer(x, w, noise, force_pallas=True))
    ref = _reference(x, w, noise)
    assert out.shape == x.shape and out.dtype == x.dtype
    assert np.allclose(np.asarray(out), ref, rtol=1e-6, atol=1e-6)
    delta = np.asarray(out) - np.asarray(x)
    assert np.allclose(delta, delta[0:1, :], atol=1e-6)       # same bias on every row
    assert np.all(np.abs(delta) <= init_range + 1e-6)         # bounded by |w|

    # ---- Test 2: non-128 feature dim + multi-step grid with ragged batch ---
    k2x, k2w, k2n, key = jax.random.split(key, 4)
    batch2, n2 = 20, 100                                        # pads to 128 lanes; 20 % 8 != 0
    w2 = init_range * (2.0 * jax.random.uniform(k2w, (n2,), dtype=jnp.float32) - 1.0)
    x2 = jax.random.normal(k2x, (batch2, n2), dtype=jnp.float32)
    noise2 = jax.random.uniform(k2n, (n2,), dtype=jnp.float32, minval=-1.0, maxval=1.0)

    out2 = jax.block_until_ready(
        noise_layer(x2, w2, noise2, force_pallas=True, max_tile_rows=8)
    )
    assert out2.shape == x2.shape and out2.dtype == x2.dtype
    assert np.allclose(np.asarray(out2), _reference(x2, w2, noise2), rtol=1e-6, atol=1e-6)

    # ---- Test 3: tiny-problem jnp fallback path ----------------------------
    k3x, k3w, k3n, key = jax.random.split(key, 4)
    batch3, n3 = 4, 64
    w3 = init_range * (2.0 * jax.random.uniform(k3w, (n3,), dtype=jnp.float32) - 1.0)
    x3 = jax.random.normal(k3x, (batch3, n3), dtype=jnp.float32)
    noise3 = jax.random.uniform(k3n, (n3,), dtype=jnp.float32, minval=-1.0, maxval=1.0)

    out3 = jax.block_until_ready(noise_layer(x3, w3, noise3))   # gated -> fused jnp
    assert out3.shape == x3.shape and out3.dtype == x3.dtype
    assert np.allclose(np.asarray(out3), _reference(x3, w3, noise3), rtol=1e-6, atol=1e-6)

    print("KERNEL_OK")
</pallas_src>

<mosaic_0001>
module attributes {stable_mosaic.version = 11 : i64} {
  func.func @noise_layer_kernel(%arg0: i32, %arg1: memref<8x128xf32, #tpu.memory_space<vmem>>, %arg2: memref<1x128xf32, #tpu.memory_space<vmem>>, %arg3: memref<1x128xf32, #tpu.memory_space<vmem>>, %arg4: memref<8x128xf32, #tpu.memory_space<vmem>>) attributes {dimension_semantics = [#tpu.dimension_semantics<parallel>], iteration_bounds = array<i64: 1>, scalar_prefetch = 0 : i64, scratch_operands = 0 : i64, tpu.core_type = #tpu.core_type<tc>, window_params = [{transform_indices = @transform_0, window_bounds = array<i64: 8, 128>}, {pipeline_mode = #tpu.pipeline_mode<synchronous>, transform_indices = @transform_1, window_bounds = array<i64: 1, 128>}, {pipeline_mode = #tpu.pipeline_mode<synchronous>, transform_indices = @transform_2, window_bounds = array<i64: 1, 128>}, {transform_indices = @transform_3, window_bounds = array<i64: 8, 128>}]} {
    %c0 = arith.constant 0 : index
    %c0_0 = arith.constant 0 : index
    %0 = vector.load %arg2[%c0, %c0_0] : memref<1x128xf32, #tpu.memory_space<vmem>>, vector<1x128xf32>
    %c0_1 = arith.constant 0 : index
    %c0_2 = arith.constant 0 : index
    %1 = vector.load %arg3[%c0_1, %c0_2] : memref<1x128xf32, #tpu.memory_space<vmem>>, vector<1x128xf32>
    %2 = arith.mulf %0, %1 : vector<1x128xf32>
    %c0_3 = arith.constant 0 : index
    %c0_4 = arith.constant 0 : index
    %3 = vector.load %arg1[%c0_3, %c0_4] : memref<8x128xf32, #tpu.memory_space<vmem>>, vector<8x128xf32>
    %4 = vector.broadcast %2 : vector<1x128xf32> to vector<8x128xf32>
    %5 = arith.addf %3, %4 : vector<8x128xf32>
    %c0_5 = arith.constant 0 : index
    %c0_6 = arith.constant 0 : index
    %6 = vector.load %arg4[%c0_5, %c0_6] : memref<8x128xf32, #tpu.memory_space<vmem>>, vector<8x128xf32>
    tpu.vector_store %arg4[%c0_5, %c0_6], %5 {strides = array<i32>} : memref<8x128xf32, #tpu.memory_space<vmem>>, vector<8x128xf32>,
    return
  }
  func.func @transform_0(%arg0: i32) -> (i32, i32) {
    %c0_i32 = arith.constant 0 : i32
    %c0_i32_0 = arith.constant 0 : i32
    return %arg0, %c0_i32 : i32, i32
  }
  func.func @transform_1(%arg0: i32) -> (i32, i32) {
    %c0_i32 = arith.constant 0 : i32
    %c0_i32_0 = arith.constant 0 : i32
    %c0_i32_1 = arith.constant 0 : i32
    return %c0_i32, %c0_i32_0 : i32, i32
  }
  func.func @transform_2(%arg0: i32) -> (i32, i32) {
    %c0_i32 = arith.constant 0 : i32
    %c0_i32_0 = arith.constant 0 : i32
    %c0_i32_1 = arith.constant 0 : i32
    return %c0_i32, %c0_i32_0 : i32, i32
  }
  func.func @transform_3(%arg0: i32) -> (i32, i32) {
    %c0_i32 = arith.constant 0 : i32
    %c0_i32_0 = arith.constant 0 : i32
    return %arg0, %c0_i32 : i32, i32
  }
}

</mosaic_0001>

<llo_original>
// kernel: tpu_custom_call.1
$region0: #{tpu_custom_call.1}
  #allocation0 [shape = 'u32[]', space=smem, size = 0x4, offset = 0x4, fixed_abs, tag = 'smem constant byte address 0x4 - core index']
  #allocation1 [shape = 'u32[144,128]{1,0:T(1,128)}', space=vmem, size = 0x12000, scoped, tag = 'internal scratch']
  %s0 = inlined_call_operand.hbm [shape: f32[8,128], index: 0, kind: input, shape index: {}]
  %s1 = inlined_call_operand.vmem [shape: f32[1,128], index: 1, kind: input, shape index: {}]
  %s2 = inlined_call_operand.vmem [shape: f32[1,128], index: 2, kind: input, shape index: {}]
  %s3 = inlined_call_operand.hbm [shape: f32[8,128], index: 3, kind: output, shape index: {}]
  %s4 = sld [smem:[#allocation0]]
  $region26: #{tpu_custom_call.1} parent=0
    _
  %s6 = ssub.s32 1, %s4
  %s7 = scalar_select 0, %s6, %s4
  $region1: #{tpu_custom_call.1} parent=0
    #allocation2 [shape = 'u8[4096]{0}', space=vmem, size = 0x1000, scoped, tag = 'input window, operand 0, single buffered']
    #allocation3 [shape = 's32[1]{0}', space=sflag, size = 0x4, scoped, tag = 'scoped memory for tpu_custom_call.1']
    #allocation4 [shape = 's32[1]{0}', space=sflag, size = 0x4, scoped, tag = 'scoped memory for tpu_custom_call.1']
    #allocation5 [shape = 'u8[4096]{0}', space=vmem, size = 0x1000, scoped, tag = 'output window, operand 0, single buffered']
    %8 = vsyncpa [#allocation3], 0
    %9 = vsyncpa [#allocation4], 0
    // Predicated region
    $region2: #{tpu_custom_call.1} parent=1 // pred_check
      _
    $region3: #{tpu_custom_call.1} parent=1 // pred_check_branch
      %11 = sbr.rel (0) target = $region5
    $region4: #{tpu_custom_call.1} parent=1 // pred_region
      %s13 = ssub.s32 128, 128
      %14 = vsyncadd [#allocation3], %s13
      %s16 = sshll.u32 [#allocation2], 4
      %s17 = int_to_ptr.vmem [resolvable:$true] %s16
      %19 = dma.hbm_to_vmem [thread:$0]  %s0, 128, %s17, [#allocation3]
    $region5: #{tpu_custom_call.1} parent=1 // pred_fallthru
      _
    // Predicated region
    $region6: #{tpu_custom_call.1} parent=1 // pred_check
      _
    $region7: #{tpu_custom_call.1} parent=1 // pred_check_branch
      %21 = sbr.rel (0) target = $region9
    $region8: #{tpu_custom_call.1} parent=1 // pred_region
      _
    $region9: #{tpu_custom_call.1} parent=1 // pred_fallthru
      _
    // Predicated region
    $region10: #{tpu_custom_call.1} parent=1 // pred_check
      _
    $region11: #{tpu_custom_call.1} parent=1 // pred_check_branch
      %23 = sbr.rel (0) target = $region13
    $region12: #{tpu_custom_call.1} parent=1 // pred_region
      _
    $region13: #{tpu_custom_call.1} parent=1 // pred_fallthru
      _
    // Predicated region
    $region14: #{tpu_custom_call.1} parent=1 // pred_check
      _
    $region15: #{tpu_custom_call.1} parent=1 // pred_check_branch
      %25 = sbr.rel (0) target = $region17
    $region16: #{tpu_custom_call.1} parent=1 // pred_region
      %26 = dma.done [#allocation3], 128
    $region17: #{tpu_custom_call.1} parent=1 // pred_fallthru
      _
    %v27 = vld [vmem:[%s1] sm:$0x1]
    %v28 = vld [vmem:[%s2] sm:$0x1]
    %v29 = vmul.f32 %v27, %v28
    %v30 = vld [vmem:[#allocation2] sm:$0xff]
    %v32 = vlaneseq
    %v33 = vshrl.u32 %v32, 7
    %v34 = vsub.s32 0, %v33
    %v35 = vrot.slane %v29, %v34
    %v37 = vadd.f32 %v30, %v35
    %38 = vst [vmem:[#allocation5] sm:$0xff] %v37
    // Predicated region
    $region18: #{tpu_custom_call.1} parent=1 // pred_check
      _
    $region19: #{tpu_custom_call.1} parent=1 // pred_check_branch
      %40 = sbr.rel (0) target = $region21
    $region20: #{tpu_custom_call.1} parent=1 // pred_region
      %s42 = ssub.s32 128, 128
      %43 = vsyncadd [#allocation4], %s42
      %s45 = sshll.u32 [#allocation5], 4
      %s46 = int_to_ptr.vmem [resolvable:$true] %s45
      %48 = dma.vmem_to_hbm [thread:$0]  %s46, 128, %s3, [#allocation4]
    $region21: #{tpu_custom_call.1} parent=1 // pred_fallthru
      _
    // Predicated region
    $region22: #{tpu_custom_call.1} parent=1 // pred_check
      _
    $region23: #{tpu_custom_call.1} parent=1 // pred_check_branch
      %50 = sbr.rel (0) target = $region25
    $region24: #{tpu_custom_call.1} parent=1 // pred_region
      %51 = dma.done [#allocation4], 128
    $region25: #{tpu_custom_call.1} parent=1 // pred_fallthru
      _
    %52 = vsyncpa [#allocation3], 1
    %53 = vsyncpa [#allocation4], 1

</llo_original>
